<compile_context>
chip_gen: v7x
topology: tpu7x:2x2x1
jax: 0.10.0
libtpu: 0.0.40
codegen_flags: <defaults>
</compile_context>

<pallas_src>
import jax
import jax.numpy as jnp
from jax.experimental import pallas as pl
from jax.experimental.pallas import tpu as pltpu

_LANE = 128


def _loss_kernel(small_ref, xc_ref, x_ref, xr_ref, out_ref, acc_rec_ref, acc_cnt_ref):
    k = pl.program_id(0)
    nsteps = pl.num_programs(0)

    # ---------------- init accumulators on first feature tile ----------------
    @pl.when(k == 0)
    def _init():
        acc_rec_ref[...] = jnp.zeros_like(acc_rec_ref)
        acc_cnt_ref[...] = jnp.zeros_like(acc_cnt_ref)

    # ---------------- streaming reconstruction-loss accumulation -------------
    # (runs every grid step; pure DMA + VPU abs/mul/add + one lane reduction)
    xt = x_ref[...].astype(jnp.float32)
    xrt = xr_ref[...].astype(jnp.float32)
    nz = jnp.where(xt != 0.0, 1.0, 0.0)
    acc_rec_ref[...] += jnp.sum(jnp.abs(xt - xrt) * nz, axis=-1, keepdims=True)
    acc_cnt_ref[...] += jnp.sum(nz, axis=-1, keepdims=True)

    # ---------------- small-tensor loss epilogue (once, last step) -----------
    @pl.when(k == nsteps - 1)
    def _epilogue():
        small = small_ref[...]                 # [B, 8] packed small inputs
        y = small[:, 0:1]                      # labels in {0, 1}
        pred = small[:, 1:3]
        xcp = small[:, 3:5]
        xsp = small[:, 5:7]
        xc = xc_ref[...]                       # [B, D]
        B = y.shape[0]
        D = xc.shape[1]
        inv_b = 1.0 / B

        def softmax2(z):
            m = jnp.max(z, axis=-1, keepdims=True)
            e = jnp.exp(z - m)
            return e / jnp.sum(e, axis=-1, keepdims=True)

        def ce(logits):
            # nn.CrossEntropyLoss (mean) with binary labels; the reference's
            # "+1e-6" is a uniform shift -> identical CE value, dropped.
            m = jnp.max(logits, axis=-1, keepdims=True)
            lse = m + jnp.log(jnp.sum(jnp.exp(logits - m), axis=-1, keepdims=True))
            pick = y * logits[:, 1:2] + (1.0 - y) * logits[:, 0:1]
            return jnp.sum(lse - pick) * inv_b

        loss_ce = ce(pred)
        loss_ce_c = ce(xcp)

        # ------------------- Center_Loss(xc, y, xc_pred) -------------------
        ps = softmax2(xcp)                  # reused for center loss AND loss_lg
        p0 = ps[:, 0:1]
        p1 = ps[:, 1:2]
        argmax1 = (p1 > p0).astype(jnp.float32)     # torch.max(...)[1], 2 classes

        rumor_true = y * argmax1 * p1                     # [B, 1]
        nonrumor_true = (1.0 - y) * (1.0 - argmax1) * p0  # [B, 1]
        sum_rt = jnp.sum(rumor_true)
        sum_nt = jnp.sum(nonrumor_true)

        r_scale = rumor_true / (sum_rt + 1e-4)
        n_scale = nonrumor_true / (sum_nt + 1e-4)
        # B, D are tiny here; for production batch sizes this weighted sum
        # could be a single [2,B]x[B,D] MXU matmul instead of axis-0 reductions.
        rumor_anchor = jnp.sum(r_scale * xc, axis=0, keepdims=True)      # [1,D]
        nonrumor_anchor = jnp.sum(n_scale * xc, axis=0, keepdims=True)   # [1,D]

        eps_w = 1e-4 / D

        def pair_sim(anchor, sel):
            # masked pair_similarity(xc[sel==1], anchor); guards avoid the
            # 0/0 NaN the torch reference produces in degenerate cases.
            diff = xc - anchor
            d = jnp.sqrt(jnp.sum(diff * diff, axis=1, keepdims=True) + eps_w)
            cnt = jnp.sum(sel)
            mean_d = jnp.sum(d * sel) / jnp.maximum(cnt, 1.0)
            dd = jnp.maximum(d - mean_d, 0.0) * sel
            nzc = jnp.sum(jnp.where(dd != 0.0, 1.0, 0.0))
            return jnp.where(nzc > 0.0, jnp.sum(dd) / jnp.maximum(nzc, 1.0), 0.0)

        ps_r = pair_sim(rumor_anchor, y)
        ps_n = pair_sim(nonrumor_anchor, 1.0 - y)

        cond_a = jnp.logical_and(sum_nt == 0.0, sum_rt != 0.0)
        cond_b = jnp.logical_and(sum_rt == 0.0, sum_nt != 0.0)
        cond_c = jnp.logical_and(sum_rt != 0.0, sum_nt != 0.0)
        loss_consis_raw = jnp.where(
            cond_c, ps_r + ps_n,
            jnp.where(cond_a, ps_r, jnp.where(cond_b, ps_n, 0.0)))

        weight = jnp.sum(rumor_true * p1 + nonrumor_true * p0) * inv_b
        weight = jnp.where(weight > 0.5, weight, 0.0)
        loss_consis = loss_consis_raw * weight

        # ------------------- likelihood gain (loss_lg) -------------------
        # softmax(xcp + 1e-6) == softmax(xcp) -> reuse ps; same for xsp.
        ps_s = softmax2(xsp)
        lg = jnp.maximum(ps - ps_s, 0.0)
        rumor_tl = lg[:, 1:2] * y
        nonrumor_tl = lg[:, 0:1] * (1.0 - y)
        sum_y = jnp.sum(y)
        sum_ny = jnp.sum(1.0 - y)
        s_r = jnp.sum(rumor_tl)
        s_n = jnp.sum(nonrumor_tl)
        both = jnp.logical_and(sum_y != 0.0, sum_ny != 0.0)
        single = jnp.logical_or(
            jnp.logical_and(sum_y == 0.0, sum_ny != 0.0),
            jnp.logical_and(sum_ny == 0.0, sum_y != 0.0))
        # NOTE: the torch reference uses the non-rumor term in BOTH
        # single-class branches; reproduced exactly.
        loss_lg = jnp.where(both, (s_r + s_n) * 0.5, jnp.where(single, s_n, 0.0))

        # ------------------- Reconstruction_Loss finalize -------------------
        # Exact divide (runs once on [B,1]; negligible cost, better accuracy
        # than the approx EUP reciprocal).
        cnt = jnp.maximum(acc_cnt_ref[...], 1.0)
        loss_rec = jnp.sum(acc_rec_ref[...] / cnt) * inv_b

        # loss_fgate = 0 in the reference
        loss = loss_ce + loss_ce_c + loss_consis + loss_rec + loss_lg

        # Pack scalar results into a lane-aligned (1, 128) output row.
        lane = jax.lax.broadcasted_iota(jnp.int32, (1, 128), 1)
        row = jnp.zeros((1, 128), jnp.float32)
        for i, v in enumerate(
                [loss, loss_ce, loss_ce_c, loss_consis, loss_rec, loss_lg]):
            row = jnp.where(lane == i, v, row)
        out_ref[...] = row


def loss_wrapper_domaincenter(preds, targets, *, max_tile_lanes=None):
    """JAX/Pallas equivalent of LossWrapper_Domaincenter.forward."""
    pred, xc_pred, xs_pred, xc, xs, x_rec, fgate = preds  # xs, fgate unused (as in torch fwd)
    y, x = targets
    B = pred.shape[0]

    # Big tensors: keep native dtype (bf16 stays bf16 on the wire), flatten like
    # torch's .view(B, -1).
    x_flat = x.reshape(B, -1)
    xr_flat = x_rec.reshape(B, -1)

    # Tiny tensors: pack into one lane-packed [B, 8] slab -> single DMA.
    y2 = y.astype(jnp.float32).reshape(B, 1)
    small = jnp.concatenate(
        [y2, pred.astype(jnp.float32), xc_pred.astype(jnp.float32),
         xs_pred.astype(jnp.float32)], axis=1)                  # [B, 7]
    small = jnp.pad(small, ((0, 0), (0, 8 - small.shape[1])))   # [B, 8]
    xc_f = xc.astype(jnp.float32)

    # ---- feature tiling: lane-dense tiles, ~2 MiB per input tile -------------
    F = x_flat.shape[1]
    itemsize = jnp.dtype(x_flat.dtype).itemsize
    target_tile_bytes = 2 << 20
    per_row = max(_LANE,
                  (target_tile_bytes // max(B * itemsize, 1)) // _LANE * _LANE)
    if max_tile_lanes is not None:
        per_row = max(_LANE, min(per_row, int(max_tile_lanes) // _LANE * _LANE))
    f_lane = -(-F // _LANE) * _LANE
    tile_f = int(min(per_row, f_lane))
    F_pad = -(-F // tile_f) * tile_f
    num_steps = F_pad // tile_f

    if F_pad != F:
        # Zero padding is exact: padded x entries have mask 0, so they
        # contribute neither to the rec sum nor to the nonzero count.
        padw = ((0, 0), (0, F_pad - F))
        x_flat = jnp.pad(x_flat, padw)
        xr_flat = jnp.pad(xr_flat, padw)

    tile_bytes = B * tile_f * itemsize
    vmem_limit = int(min(max(4 * tile_bytes + (8 << 20), 16 << 20), 64 << 20))

    big_bytes = 2 * B * F_pad * itemsize
    cost = pl.CostEstimate(
        flops=int(4 * B * F_pad + 64 * B),
        transcendentals=int(8 * B),
        bytes_accessed=int(big_bytes + small.size * 4 + xc_f.size * 4 + 512),
    )

    out = pl.pallas_call(
        _loss_kernel,
        out_shape=jax.ShapeDtypeStruct((1, 128), jnp.float32),
        grid=(num_steps,),
        in_specs=[
            pl.BlockSpec(small.shape, lambda k: (0, 0)),     # resident
            pl.BlockSpec(xc_f.shape, lambda k: (0, 0)),      # resident
            pl.BlockSpec((B, tile_f), lambda k: (0, k)),     # streamed x
            pl.BlockSpec((B, tile_f), lambda k: (0, k)),     # streamed x_rec
        ],
        out_specs=pl.BlockSpec((1, 128), lambda k: (0, 0)),
        scratch_shapes=[
            pltpu.VMEM((B, 1), jnp.float32),   # per-row rec sum accumulator
            pltpu.VMEM((B, 1), jnp.float32),   # per-row nonzero count
        ],
        compiler_params=pltpu.CompilerParams(
            dimension_semantics=("arbitrary",),   # feature axis = reduction
            vmem_limit_bytes=vmem_limit),
        cost_estimate=cost,
    )(small, xc_f, x_flat, xr_flat)

    loss = out[0, 0]
    loss_list = (out[0, 1], out[0, 2], out[0, 3], out[0, 4])
    return loss, loss_list


if __name__ == "__main__":
    key = jax.random.PRNGKey(0)
    B, D, C, H, W = 8, 32, 4, 16, 16   # batch, feature dim, NCHW input dims
    ks = jax.random.split(key, 8)

    pred = jax.random.normal(ks[0], (B, 2), jnp.float32)
    xc_pred = jax.random.normal(ks[1], (B, 2), jnp.float32)
    xs_pred = jax.random.normal(ks[2], (B, 2), jnp.float32)
    xc = jax.random.normal(ks[3], (B, D), jnp.float32)
    xs = jax.random.normal(ks[4], (B, D), jnp.float32)
    x_rec = jax.random.normal(ks[5], (B, C, H, W), jnp.float32)
    fgate = jax.random.normal(ks[6], (B, D), jnp.float32)
    x = jax.random.normal(ks[7], (B, C, H, W), jnp.float32)
    y = jnp.array([0, 1, 0, 1, 1, 0, 1, 0], dtype=jnp.int32)

    preds = (pred, xc_pred, xs_pred, xc, xs, x_rec, fgate)
    targets = (y, x)

    # Default tiling (single feature tile at this toy size).
    loss, loss_list = loss_wrapper_domaincenter(preds, targets)
    jax.block_until_ready(loss)
    jax.block_until_ready(loss_list)

    # Force multi-step streaming path (4 feature tiles of 256 lanes) to
    # exercise the pipelined accumulate + pl.when(init/finalize) logic.
    loss2, loss_list2 = loss_wrapper_domaincenter(preds, targets, max_tile_lanes=256)
    jax.block_until_ready(loss2)
    jax.block_until_ready(loss_list2)

    print("KERNEL_OK")
</pallas_src>

<mosaic_0001>
module attributes {stable_mosaic.version = 11 : i64} {
  func.func @_loss_kernel(%arg0: i32, %arg1: memref<8x8xf32, #tpu.memory_space<vmem>>, %arg2: memref<8x32xf32, #tpu.memory_space<vmem>>, %arg3: memref<8x1024xf32, #tpu.memory_space<vmem>>, %arg4: memref<8x1024xf32, #tpu.memory_space<vmem>>, %arg5: memref<1x128xf32, #tpu.memory_space<vmem>>, %arg6: memref<8x1xf32, #tpu.memory_space<vmem>>, %arg7: memref<8x1xf32, #tpu.memory_space<vmem>>) attributes {dimension_semantics = [#tpu.dimension_semantics<arbitrary>], iteration_bounds = array<i64: 1>, scalar_prefetch = 0 : i64, scratch_operands = 2 : i64, tpu.core_type = #tpu.core_type<tc>, window_params = [{pipeline_mode = #tpu.pipeline_mode<synchronous>, transform_indices = @transform_0, window_bounds = array<i64: 8, 8>}, {pipeline_mode = #tpu.pipeline_mode<synchronous>, transform_indices = @transform_1, window_bounds = array<i64: 8, 32>}, {transform_indices = @transform_2, window_bounds = array<i64: 8, 1024>}, {transform_indices = @transform_3, window_bounds = array<i64: 8, 1024>}, {pipeline_mode = #tpu.pipeline_mode<synchronous>, transform_indices = @transform_4, window_bounds = array<i64: 1, 128>}]} {
    %c0_i32 = arith.constant 0 : i32
    %0 = arith.cmpi eq, %arg0, %c0_i32 : i32
    %1 = arith.extui %0 : i1 to i32
    %c0_i32_0 = arith.constant 0 : i32
    %2 = arith.cmpi ne, %1, %c0_i32_0 : i32
    scf.if %2 {
      %cst_18 = arith.constant 0.000000e+00 : f32
      %26 = vector.broadcast %cst_18 : f32 to vector<8x1xf32>
      %c0_19 = arith.constant 0 : index
      %c0_20 = arith.constant 0 : index
      %27 = vector.load %arg6[%c0_19, %c0_20] : memref<8x1xf32, #tpu.memory_space<vmem>>, vector<8x1xf32>
      tpu.vector_store %arg6[%c0_19, %c0_20], %26 {strides = array<i32>} : memref<8x1xf32, #tpu.memory_space<vmem>>, vector<8x1xf32>,
      %cst_21 = arith.constant 0.000000e+00 : f32
      %28 = vector.broadcast %cst_21 : f32 to vector<8x1xf32>
      %c0_22 = arith.constant 0 : index
      %c0_23 = arith.constant 0 : index
      %29 = vector.load %arg7[%c0_22, %c0_23] : memref<8x1xf32, #tpu.memory_space<vmem>>, vector<8x1xf32>
      tpu.vector_store %arg7[%c0_22, %c0_23], %28 {strides = array<i32>} : memref<8x1xf32, #tpu.memory_space<vmem>>, vector<8x1xf32>,
    } else {
    }
    %c0 = arith.constant 0 : index
    %c0_1 = arith.constant 0 : index
    %3 = vector.load %arg3[%c0, %c0_1] : memref<8x1024xf32, #tpu.memory_space<vmem>>, vector<8x1024xf32>
    %c0_2 = arith.constant 0 : index
    %c0_3 = arith.constant 0 : index
    %4 = vector.load %arg4[%c0_2, %c0_3] : memref<8x1024xf32, #tpu.memory_space<vmem>>, vector<8x1024xf32>
    %cst = arith.constant 0.000000e+00 : f32
    %5 = vector.broadcast %cst : f32 to vector<8x1024xf32>
    %6 = arith.cmpf one, %3, %5 : vector<8x1024xf32>
    %cst_4 = arith.constant 1.000000e+00 : f32
    %cst_5 = arith.constant 0.000000e+00 : f32
    %7 = vector.broadcast %cst_4 : f32 to vector<8x1024xf32>
    %8 = vector.broadcast %cst_5 : f32 to vector<8x1024xf32>
    %9 = arith.select %6, %7, %8 : vector<8x1024xi1>, vector<8x1024xf32>
    %c0_6 = arith.constant 0 : index
    %c0_7 = arith.constant 0 : index
    %10 = vector.load %arg6[%c0_6, %c0_7] : memref<8x1xf32, #tpu.memory_space<vmem>>, vector<8x1xf32>
    %11 = arith.subf %3, %4 : vector<8x1024xf32>
    %12 = math.absf %11 : vector<8x1024xf32>
    %13 = arith.mulf %12, %9 : vector<8x1024xf32>
    %cst_8 = arith.constant dense<0.000000e+00> : vector<8xf32>
    %14 = vector.multi_reduction <add>, %13, %cst_8 [1] : vector<8x1024xf32> to vector<8xf32>
    %15 = vector.shape_cast %14 : vector<8xf32> to vector<8x1xf32>
    %16 = arith.addf %10, %15 : vector<8x1xf32>
    %c0_9 = arith.constant 0 : index
    %c0_10 = arith.constant 0 : index
    %17 = vector.load %arg6[%c0_9, %c0_10] : memref<8x1xf32, #tpu.memory_space<vmem>>, vector<8x1xf32>
    tpu.vector_store %arg6[%c0_9, %c0_10], %16 {strides = array<i32>} : memref<8x1xf32, #tpu.memory_space<vmem>>, vector<8x1xf32>,
    %c0_11 = arith.constant 0 : index
    %c0_12 = arith.constant 0 : index
    %18 = vector.load %arg7[%c0_11, %c0_12] : memref<8x1xf32, #tpu.memory_space<vmem>>, vector<8x1xf32>
    %cst_13 = arith.constant dense<0.000000e+00> : vector<8xf32>
    %19 = vector.multi_reduction <add>, %9, %cst_13 [1] : vector<8x1024xf32> to vector<8xf32>
    %20 = vector.shape_cast %19 : vector<8xf32> to vector<8x1xf32>
    %21 = arith.addf %18, %20 : vector<8x1xf32>
    %c0_14 = arith.constant 0 : index
    %c0_15 = arith.constant 0 : index
    %22 = vector.load %arg7[%c0_14, %c0_15] : memref<8x1xf32, #tpu.memory_space<vmem>>, vector<8x1xf32>
    tpu.vector_store %arg7[%c0_14, %c0_15], %21 {strides = array<i32>} : memref<8x1xf32, #tpu.memory_space<vmem>>, vector<8x1xf32>,
    %c0_i32_16 = arith.constant 0 : i32
    %23 = arith.cmpi eq, %arg0, %c0_i32_16 : i32
    %24 = arith.extui %23 : i1 to i32
    %c0_i32_17 = arith.constant 0 : i32
    %25 = arith.cmpi ne, %24, %c0_i32_17 : i32
    scf.if %25 {
      %c0_18 = arith.constant 0 : index
      %c0_19 = arith.constant 0 : index
      %26 = vector.load %arg1[%c0_18, %c0_19] : memref<8x8xf32, #tpu.memory_space<vmem>>, vector<8x8xf32>
      %27 = vector.extract_strided_slice %26 {offsets = [0, 0], sizes = [8, 1], strides = [1, 1]} : vector<8x8xf32> to vector<8x1xf32>
      %28 = vector.extract_strided_slice %26 {offsets = [0, 1], sizes = [8, 2], strides = [1, 1]} : vector<8x8xf32> to vector<8x2xf32>
      %29 = vector.extract_strided_slice %26 {offsets = [0, 3], sizes = [8, 2], strides = [1, 1]} : vector<8x8xf32> to vector<8x2xf32>
      %30 = vector.extract_strided_slice %26 {offsets = [0, 5], sizes = [8, 2], strides = [1, 1]} : vector<8x8xf32> to vector<8x2xf32>
      %c0_20 = arith.constant 0 : index
      %c0_21 = arith.constant 0 : index
      %31 = vector.load %arg2[%c0_20, %c0_21] : memref<8x32xf32, #tpu.memory_space<vmem>>, vector<8x32xf32>
      %cst_22 = arith.constant dense<0xFF800000> : vector<8xf32>
      %32 = vector.multi_reduction <maximumf>, %28, %cst_22 [1] : vector<8x2xf32> to vector<8xf32>
      %33 = vector.shape_cast %32 : vector<8xf32> to vector<8x1xf32>
      %34 = vector.broadcast %33 : vector<8x1xf32> to vector<8x2xf32>
      %35 = arith.subf %28, %34 : vector<8x2xf32>
      %36 = math.exp %35 : vector<8x2xf32>
      %cst_23 = arith.constant dense<0.000000e+00> : vector<8xf32>
      %37 = vector.multi_reduction <add>, %36, %cst_23 [1] : vector<8x2xf32> to vector<8xf32>
      %38 = vector.shape_cast %37 : vector<8xf32> to vector<8x1xf32>
      %39 = math.log %38 : vector<8x1xf32>
      %40 = arith.addf %33, %39 : vector<8x1xf32>
      %41 = vector.extract_strided_slice %28 {offsets = [0, 1], sizes = [8, 1], strides = [1, 1]} : vector<8x2xf32> to vector<8x1xf32>
      %42 = arith.mulf %27, %41 : vector<8x1xf32>
      %cst_24 = arith.constant 1.000000e+00 : f32
      %43 = vector.broadcast %cst_24 : f32 to vector<8x1xf32>
      %44 = arith.subf %43, %27 : vector<8x1xf32>
      %45 = vector.extract_strided_slice %28 {offsets = [0, 0], sizes = [8, 1], strides = [1, 1]} : vector<8x2xf32> to vector<8x1xf32>
      %46 = arith.mulf %44, %45 : vector<8x1xf32>
      %47 = arith.addf %42, %46 : vector<8x1xf32>
      %48 = arith.subf %40, %47 : vector<8x1xf32>
      %49 = vector.shape_cast %48 : vector<8x1xf32> to vector<1x8x1xf32>
      %cst_25 = arith.constant dense<0.000000e+00> : vector<1xf32>
      %50 = vector.multi_reduction <add>, %49, %cst_25 [1, 2] : vector<1x8x1xf32> to vector<1xf32>
      %51 = vector.shape_cast %50 : vector<1xf32> to vector<1x1x1xf32>
      %52 = vector.extract %51[0, 0, 0] : f32 from vector<1x1x1xf32>
      %cst_26 = arith.constant 1.250000e-01 : f32
      %53 = arith.mulf %52, %cst_26 : f32
      %cst_27 = arith.constant dense<0xFF800000> : vector<8xf32>
      %54 = vector.multi_reduction <maximumf>, %29, %cst_27 [1] : vector<8x2xf32> to vector<8xf32>
      %55 = vector.shape_cast %54 : vector<8xf32> to vector<8x1xf32>
      %56 = vector.broadcast %55 : vector<8x1xf32> to vector<8x2xf32>
      %57 = arith.subf %29, %56 : vector<8x2xf32>
      %58 = math.exp %57 : vector<8x2xf32>
      %cst_28 = arith.constant dense<0.000000e+00> : vector<8xf32>
      %59 = vector.multi_reduction <add>, %58, %cst_28 [1] : vector<8x2xf32> to vector<8xf32>
      %60 = vector.shape_cast %59 : vector<8xf32> to vector<8x1xf32>
      %61 = math.log %60 : vector<8x1xf32>
      %62 = arith.addf %55, %61 : vector<8x1xf32>
      %63 = vector.extract_strided_slice %29 {offsets = [0, 1], sizes = [8, 1], strides = [1, 1]} : vector<8x2xf32> to vector<8x1xf32>
      %64 = arith.mulf %27, %63 : vector<8x1xf32>
      %cst_29 = arith.constant 1.000000e+00 : f32
      %65 = vector.broadcast %cst_29 : f32 to vector<8x1xf32>
      %66 = arith.subf %65, %27 : vector<8x1xf32>
      %67 = vector.extract_strided_slice %29 {offsets = [0, 0], sizes = [8, 1], strides = [1, 1]} : vector<8x2xf32> to vector<8x1xf32>
      %68 = arith.mulf %66, %67 : vector<8x1xf32>
      %69 = arith.addf %64, %68 : vector<8x1xf32>
      %70 = arith.subf %62, %69 : vector<8x1xf32>
      %71 = vector.shape_cast %70 : vector<8x1xf32> to vector<1x8x1xf32>
      %cst_30 = arith.constant dense<0.000000e+00> : vector<1xf32>
      %72 = vector.multi_reduction <add>, %71, %cst_30 [1, 2] : vector<1x8x1xf32> to vector<1xf32>
      %73 = vector.shape_cast %72 : vector<1xf32> to vector<1x1x1xf32>
      %74 = vector.extract %73[0, 0, 0] : f32 from vector<1x1x1xf32>
      %cst_31 = arith.constant 1.250000e-01 : f32
      %75 = arith.mulf %74, %cst_31 : f32
      %cst_32 = arith.constant dense<0xFF800000> : vector<8xf32>
      %76 = vector.multi_reduction <maximumf>, %29, %cst_32 [1] : vector<8x2xf32> to vector<8xf32>
      %77 = vector.shape_cast %76 : vector<8xf32> to vector<8x1xf32>
      %78 = vector.broadcast %77 : vector<8x1xf32> to vector<8x2xf32>
      %79 = arith.subf %29, %78 : vector<8x2xf32>
      %80 = math.exp %79 : vector<8x2xf32>
      %cst_33 = arith.constant dense<0.000000e+00> : vector<8xf32>
      %81 = vector.multi_reduction <add>, %80, %cst_33 [1] : vector<8x2xf32> to vector<8xf32>
      %82 = vector.shape_cast %81 : vector<8xf32> to vector<8x1xf32>
      %83 = vector.broadcast %82 : vector<8x1xf32> to vector<8x2xf32>
      %84 = arith.divf %80, %83 : vector<8x2xf32>
      %85 = vector.extract_strided_slice %84 {offsets = [0, 0], sizes = [8, 1], strides = [1, 1]} : vector<8x2xf32> to vector<8x1xf32>
      %86 = vector.extract_strided_slice %84 {offsets = [0, 1], sizes = [8, 1], strides = [1, 1]} : vector<8x2xf32> to vector<8x1xf32>
      %87 = arith.cmpf ogt, %86, %85 : vector<8x1xf32>
      %88 = arith.extui %87 : vector<8x1xi1> to vector<8x1xi32>
      %89 = arith.sitofp %88 : vector<8x1xi32> to vector<8x1xf32>
      %90 = arith.mulf %27, %89 : vector<8x1xf32>
      %91 = arith.mulf %90, %86 : vector<8x1xf32>
      %cst_34 = arith.constant 1.000000e+00 : f32
      %92 = vector.broadcast %cst_34 : f32 to vector<8x1xf32>
      %93 = arith.subf %92, %27 : vector<8x1xf32>
      %cst_35 = arith.constant 1.000000e+00 : f32
      %94 = vector.broadcast %cst_35 : f32 to vector<8x1xf32>
      %95 = arith.subf %94, %89 : vector<8x1xf32>
      %96 = arith.mulf %93, %95 : vector<8x1xf32>
      %97 = arith.mulf %96, %85 : vector<8x1xf32>
      %98 = vector.shape_cast %91 : vector<8x1xf32> to vector<1x8x1xf32>
      %cst_36 = arith.constant dense<0.000000e+00> : vector<1xf32>
      %99 = vector.multi_reduction <add>, %98, %cst_36 [1, 2] : vector<1x8x1xf32> to vector<1xf32>
      %100 = vector.shape_cast %99 : vector<1xf32> to vector<1x1x1xf32>
      %101 = vector.extract %100[0, 0, 0] : f32 from vector<1x1x1xf32>
      %102 = vector.shape_cast %97 : vector<8x1xf32> to vector<1x8x1xf32>
      %cst_37 = arith.constant dense<0.000000e+00> : vector<1xf32>
      %103 = vector.multi_reduction <add>, %102, %cst_37 [1, 2] : vector<1x8x1xf32> to vector<1xf32>
      %104 = vector.shape_cast %103 : vector<1xf32> to vector<1x1x1xf32>
      %105 = vector.extract %104[0, 0, 0] : f32 from vector<1x1x1xf32>
      %cst_38 = arith.constant 9.99999974E-5 : f32
      %106 = arith.addf %101, %cst_38 : f32
      %107 = vector.broadcast %106 : f32 to vector<8x1xf32>
      %108 = arith.divf %91, %107 : vector<8x1xf32>
      %cst_39 = arith.constant 9.99999974E-5 : f32
      %109 = arith.addf %105, %cst_39 : f32
      %110 = vector.broadcast %109 : f32 to vector<8x1xf32>
      %111 = arith.divf %97, %110 : vector<8x1xf32>
      %112 = vector.broadcast %108 : vector<8x1xf32> to vector<8x32xf32>
      %113 = arith.mulf %112, %31 : vector<8x32xf32>
      %cst_40 = arith.constant dense<0.000000e+00> : vector<32xf32>
      %114 = vector.multi_reduction <add>, %113, %cst_40 [0] : vector<8x32xf32> to vector<32xf32>
      %115 = vector.shape_cast %114 : vector<32xf32> to vector<1x32xf32>
      %116 = vector.broadcast %111 : vector<8x1xf32> to vector<8x32xf32>
      %117 = arith.mulf %116, %31 : vector<8x32xf32>
      %cst_41 = arith.constant dense<0.000000e+00> : vector<32xf32>
      %118 = vector.multi_reduction <add>, %117, %cst_41 [0] : vector<8x32xf32> to vector<32xf32>
      %119 = vector.shape_cast %118 : vector<32xf32> to vector<1x32xf32>
      %120 = vector.broadcast %115 : vector<1x32xf32> to vector<8x32xf32>
      %121 = arith.subf %31, %120 : vector<8x32xf32>
      %122 = arith.mulf %121, %121 : vector<8x32xf32>
      %cst_42 = arith.constant dense<0.000000e+00> : vector<8xf32>
      %123 = vector.multi_reduction <add>, %122, %cst_42 [1] : vector<8x32xf32> to vector<8xf32>
      %124 = vector.shape_cast %123 : vector<8xf32> to vector<8x1xf32>
      %cst_43 = arith.constant 3.125000e-06 : f32
      %125 = vector.broadcast %cst_43 : f32 to vector<8x1xf32>
      %126 = arith.addf %124, %125 : vector<8x1xf32>
      %127 = math.sqrt %126 : vector<8x1xf32>
      %128 = vector.shape_cast %27 : vector<8x1xf32> to vector<1x8x1xf32>
      %cst_44 = arith.constant dense<0.000000e+00> : vector<1xf32>
      %129 = vector.multi_reduction <add>, %128, %cst_44 [1, 2] : vector<1x8x1xf32> to vector<1xf32>
      %130 = vector.shape_cast %129 : vector<1xf32> to vector<1x1x1xf32>
      %131 = vector.extract %130[0, 0, 0] : f32 from vector<1x1x1xf32>
      %132 = arith.mulf %127, %27 : vector<8x1xf32>
      %133 = vector.shape_cast %132 : vector<8x1xf32> to vector<1x8x1xf32>
      %cst_45 = arith.constant dense<0.000000e+00> : vector<1xf32>
      %134 = vector.multi_reduction <add>, %133, %cst_45 [1, 2] : vector<1x8x1xf32> to vector<1xf32>
      %135 = vector.shape_cast %134 : vector<1xf32> to vector<1x1x1xf32>
      %136 = vector.extract %135[0, 0, 0] : f32 from vector<1x1x1xf32>
      %cst_46 = arith.constant 1.000000e+00 : f32
      %137 = arith.maximumf %131, %cst_46 : f32
      %138 = arith.divf %136, %137 : f32
      %139 = vector.broadcast %138 : f32 to vector<8x1xf32>
      %140 = arith.subf %127, %139 : vector<8x1xf32>
      %cst_47 = arith.constant 0.000000e+00 : f32
      %141 = vector.broadcast %cst_47 : f32 to vector<8x1xf32>
      %142 = arith.maximumf %140, %141 : vector<8x1xf32>
      %143 = arith.mulf %142, %27 : vector<8x1xf32>
      %cst_48 = arith.constant 0.000000e+00 : f32
      %144 = vector.broadcast %cst_48 : f32 to vector<8x1xf32>
      %145 = arith.cmpf one, %143, %144 : vector<8x1xf32>
      %cst_49 = arith.constant 1.000000e+00 : f32
      %cst_50 = arith.constant 0.000000e+00 : f32
      %146 = vector.broadcast %cst_49 : f32 to vector<8x1xf32>
      %147 = vector.broadcast %cst_50 : f32 to vector<8x1xf32>
      %148 = arith.select %145, %146, %147 : vector<8x1xi1>, vector<8x1xf32>
      %149 = vector.shape_cast %148 : vector<8x1xf32> to vector<1x8x1xf32>
      %cst_51 = arith.constant dense<0.000000e+00> : vector<1xf32>
      %150 = vector.multi_reduction <add>, %149, %cst_51 [1, 2] : vector<1x8x1xf32> to vector<1xf32>
      %151 = vector.shape_cast %150 : vector<1xf32> to vector<1x1x1xf32>
      %152 = vector.extract %151[0, 0, 0] : f32 from vector<1x1x1xf32>
      %cst_52 = arith.constant 0.000000e+00 : f32
      %153 = arith.cmpf ogt, %152, %cst_52 : f32
      %154 = vector.shape_cast %143 : vector<8x1xf32> to vector<1x8x1xf32>
      %cst_53 = arith.constant dense<0.000000e+00> : vector<1xf32>
      %155 = vector.multi_reduction <add>, %154, %cst_53 [1, 2] : vector<1x8x1xf32> to vector<1xf32>
      %156 = vector.shape_cast %155 : vector<1xf32> to vector<1x1x1xf32>
      %157 = vector.extract %156[0, 0, 0] : f32 from vector<1x1x1xf32>
      %cst_54 = arith.constant 1.000000e+00 : f32
      %158 = arith.maximumf %152, %cst_54 : f32
      %159 = arith.divf %157, %158 : f32
      %cst_55 = arith.constant 0.000000e+00 : f32
      %160 = arith.select %153, %159, %cst_55 : f32
      %cst_56 = arith.constant 1.000000e+00 : f32
      %161 = vector.broadcast %cst_56 : f32 to vector<8x1xf32>
      %162 = arith.subf %161, %27 : vector<8x1xf32>
      %163 = vector.broadcast %119 : vector<1x32xf32> to vector<8x32xf32>
      %164 = arith.subf %31, %163 : vector<8x32xf32>
      %165 = arith.mulf %164, %164 : vector<8x32xf32>
      %cst_57 = arith.constant dense<0.000000e+00> : vector<8xf32>
      %166 = vector.multi_reduction <add>, %165, %cst_57 [1] : vector<8x32xf32> to vector<8xf32>
      %167 = vector.shape_cast %166 : vector<8xf32> to vector<8x1xf32>
      %cst_58 = arith.constant 3.125000e-06 : f32
      %168 = vector.broadcast %cst_58 : f32 to vector<8x1xf32>
      %169 = arith.addf %167, %168 : vector<8x1xf32>
      %170 = math.sqrt %169 : vector<8x1xf32>
      %171 = vector.shape_cast %162 : vector<8x1xf32> to vector<1x8x1xf32>
      %cst_59 = arith.constant dense<0.000000e+00> : vector<1xf32>
      %172 = vector.multi_reduction <add>, %171, %cst_59 [1, 2] : vector<1x8x1xf32> to vector<1xf32>
      %173 = vector.shape_cast %172 : vector<1xf32> to vector<1x1x1xf32>
      %174 = vector.extract %173[0, 0, 0] : f32 from vector<1x1x1xf32>
      %175 = arith.mulf %170, %162 : vector<8x1xf32>
      %176 = vector.shape_cast %175 : vector<8x1xf32> to vector<1x8x1xf32>
      %cst_60 = arith.constant dense<0.000000e+00> : vector<1xf32>
      %177 = vector.multi_reduction <add>, %176, %cst_60 [1, 2] : vector<1x8x1xf32> to vector<1xf32>
      %178 = vector.shape_cast %177 : vector<1xf32> to vector<1x1x1xf32>
      %179 = vector.extract %178[0, 0, 0] : f32 from vector<1x1x1xf32>
      %cst_61 = arith.constant 1.000000e+00 : f32
      %180 = arith.maximumf %174, %cst_61 : f32
      %181 = arith.divf %179, %180 : f32
      %182 = vector.broadcast %181 : f32 to vector<8x1xf32>
      %183 = arith.subf %170, %182 : vector<8x1xf32>
      %cst_62 = arith.constant 0.000000e+00 : f32
      %184 = vector.broadcast %cst_62 : f32 to vector<8x1xf32>
      %185 = arith.maximumf %183, %184 : vector<8x1xf32>
      %186 = arith.mulf %185, %162 : vector<8x1xf32>
      %cst_63 = arith.constant 0.000000e+00 : f32
      %187 = vector.broadcast %cst_63 : f32 to vector<8x1xf32>
      %188 = arith.cmpf one, %186, %187 : vector<8x1xf32>
      %cst_64 = arith.constant 1.000000e+00 : f32
      %cst_65 = arith.constant 0.000000e+00 : f32
      %189 = vector.broadcast %cst_64 : f32 to vector<8x1xf32>
      %190 = vector.broadcast %cst_65 : f32 to vector<8x1xf32>
      %191 = arith.select %188, %189, %190 : vector<8x1xi1>, vector<8x1xf32>
      %192 = vector.shape_cast %191 : vector<8x1xf32> to vector<1x8x1xf32>
      %cst_66 = arith.constant dense<0.000000e+00> : vector<1xf32>
      %193 = vector.multi_reduction <add>, %192, %cst_66 [1, 2] : vector<1x8x1xf32> to vector<1xf32>
      %194 = vector.shape_cast %193 : vector<1xf32> to vector<1x1x1xf32>
      %195 = vector.extract %194[0, 0, 0] : f32 from vector<1x1x1xf32>
      %cst_67 = arith.constant 0.000000e+00 : f32
      %196 = arith.cmpf ogt, %195, %cst_67 : f32
      %197 = vector.shape_cast %186 : vector<8x1xf32> to vector<1x8x1xf32>
      %cst_68 = arith.constant dense<0.000000e+00> : vector<1xf32>
      %198 = vector.multi_reduction <add>, %197, %cst_68 [1, 2] : vector<1x8x1xf32> to vector<1xf32>
      %199 = vector.shape_cast %198 : vector<1xf32> to vector<1x1x1xf32>
      %200 = vector.extract %199[0, 0, 0] : f32 from vector<1x1x1xf32>
      %cst_69 = arith.constant 1.000000e+00 : f32
      %201 = arith.maximumf %195, %cst_69 : f32
      %202 = arith.divf %200, %201 : f32
      %cst_70 = arith.constant 0.000000e+00 : f32
      %203 = arith.select %196, %202, %cst_70 : f32
      %cst_71 = arith.constant 0.000000e+00 : f32
      %204 = arith.cmpf oeq, %105, %cst_71 : f32
      %cst_72 = arith.constant 0.000000e+00 : f32
      %205 = arith.cmpf one, %101, %cst_72 : f32
      %206 = arith.andi %204, %205 : i1
      %cst_73 = arith.constant 0.000000e+00 : f32
      %207 = arith.cmpf oeq, %101, %cst_73 : f32
      %cst_74 = arith.constant 0.000000e+00 : f32
      %208 = arith.cmpf one, %105, %cst_74 : f32
      %209 = arith.andi %207, %208 : i1
      %cst_75 = arith.constant 0.000000e+00 : f32
      %210 = arith.cmpf one, %101, %cst_75 : f32
      %cst_76 = arith.constant 0.000000e+00 : f32
      %211 = arith.cmpf one, %105, %cst_76 : f32
      %212 = arith.andi %210, %211 : i1
      %213 = arith.addf %160, %203 : f32
      %cst_77 = arith.constant 0.000000e+00 : f32
      %214 = arith.select %209, %203, %cst_77 : f32
      %215 = arith.select %206, %160, %214 : f32
      %216 = arith.select %212, %213, %215 : f32
      %217 = arith.mulf %91, %86 : vector<8x1xf32>
      %218 = arith.mulf %97, %85 : vector<8x1xf32>
      %219 = arith.addf %217, %218 : vector<8x1xf32>
      %220 = vector.shape_cast %219 : vector<8x1xf32> to vector<1x8x1xf32>
      %cst_78 = arith.constant dense<0.000000e+00> : vector<1xf32>
      %221 = vector.multi_reduction <add>, %220, %cst_78 [1, 2] : vector<1x8x1xf32> to vector<1xf32>
      %222 = vector.shape_cast %221 : vector<1xf32> to vector<1x1x1xf32>
      %223 = vector.extract %222[0, 0, 0] : f32 from vector<1x1x1xf32>
      %cst_79 = arith.constant 1.250000e-01 : f32
      %224 = arith.mulf %223, %cst_79 : f32
      %cst_80 = arith.constant 5.000000e-01 : f32
      %225 = arith.cmpf ogt, %224, %cst_80 : f32
      %cst_81 = arith.constant 0.000000e+00 : f32
      %226 = arith.select %225, %224, %cst_81 : f32
      %227 = arith.mulf %216, %226 : f32
      %cst_82 = arith.constant dense<0xFF800000> : vector<8xf32>
      %228 = vector.multi_reduction <maximumf>, %30, %cst_82 [1] : vector<8x2xf32> to vector<8xf32>
      %229 = vector.shape_cast %228 : vector<8xf32> to vector<8x1xf32>
      %230 = vector.broadcast %229 : vector<8x1xf32> to vector<8x2xf32>
      %231 = arith.subf %30, %230 : vector<8x2xf32>
      %232 = math.exp %231 : vector<8x2xf32>
      %cst_83 = arith.constant dense<0.000000e+00> : vector<8xf32>
      %233 = vector.multi_reduction <add>, %232, %cst_83 [1] : vector<8x2xf32> to vector<8xf32>
      %234 = vector.shape_cast %233 : vector<8xf32> to vector<8x1xf32>
      %235 = vector.broadcast %234 : vector<8x1xf32> to vector<8x2xf32>
      %236 = arith.divf %232, %235 : vector<8x2xf32>
      %237 = arith.subf %84, %236 : vector<8x2xf32>
      %cst_84 = arith.constant 0.000000e+00 : f32
      %238 = vector.broadcast %cst_84 : f32 to vector<8x2xf32>
      %239 = arith.maximumf %237, %238 : vector<8x2xf32>
      %240 = vector.extract_strided_slice %239 {offsets = [0, 1], sizes = [8, 1], strides = [1, 1]} : vector<8x2xf32> to vector<8x1xf32>
      %241 = arith.mulf %240, %27 : vector<8x1xf32>
      %242 = vector.extract_strided_slice %239 {offsets = [0, 0], sizes = [8, 1], strides = [1, 1]} : vector<8x2xf32> to vector<8x1xf32>
      %cst_85 = arith.constant 1.000000e+00 : f32
      %243 = vector.broadcast %cst_85 : f32 to vector<8x1xf32>
      %244 = arith.subf %243, %27 : vector<8x1xf32>
      %245 = arith.mulf %242, %244 : vector<8x1xf32>
      %246 = vector.shape_cast %27 : vector<8x1xf32> to vector<1x8x1xf32>
      %cst_86 = arith.constant dense<0.000000e+00> : vector<1xf32>
      %247 = vector.multi_reduction <add>, %246, %cst_86 [1, 2] : vector<1x8x1xf32> to vector<1xf32>
      %248 = vector.shape_cast %247 : vector<1xf32> to vector<1x1x1xf32>
      %249 = vector.extract %248[0, 0, 0] : f32 from vector<1x1x1xf32>
      %cst_87 = arith.constant 1.000000e+00 : f32
      %250 = vector.broadcast %cst_87 : f32 to vector<8x1xf32>
      %251 = arith.subf %250, %27 : vector<8x1xf32>
      %252 = vector.shape_cast %251 : vector<8x1xf32> to vector<1x8x1xf32>
      %cst_88 = arith.constant dense<0.000000e+00> : vector<1xf32>
      %253 = vector.multi_reduction <add>, %252, %cst_88 [1, 2] : vector<1x8x1xf32> to vector<1xf32>
      %254 = vector.shape_cast %253 : vector<1xf32> to vector<1x1x1xf32>
      %255 = vector.extract %254[0, 0, 0] : f32 from vector<1x1x1xf32>
      %256 = vector.shape_cast %241 : vector<8x1xf32> to vector<1x8x1xf32>
      %cst_89 = arith.constant dense<0.000000e+00> : vector<1xf32>
      %257 = vector.multi_reduction <add>, %256, %cst_89 [1, 2] : vector<1x8x1xf32> to vector<1xf32>
      %258 = vector.shape_cast %257 : vector<1xf32> to vector<1x1x1xf32>
      %259 = vector.extract %258[0, 0, 0] : f32 from vector<1x1x1xf32>
      %260 = vector.shape_cast %245 : vector<8x1xf32> to vector<1x8x1xf32>
      %cst_90 = arith.constant dense<0.000000e+00> : vector<1xf32>
      %261 = vector.multi_reduction <add>, %260, %cst_90 [1, 2] : vector<1x8x1xf32> to vector<1xf32>
      %262 = vector.shape_cast %261 : vector<1xf32> to vector<1x1x1xf32>
      %263 = vector.extract %262[0, 0, 0] : f32 from vector<1x1x1xf32>
      %cst_91 = arith.constant 0.000000e+00 : f32
      %264 = arith.cmpf one, %249, %cst_91 : f32
      %cst_92 = arith.constant 0.000000e+00 : f32
      %265 = arith.cmpf one, %255, %cst_92 : f32
      %266 = arith.andi %264, %265 : i1
      %cst_93 = arith.constant 0.000000e+00 : f32
      %267 = arith.cmpf oeq, %249, %cst_93 : f32
      %cst_94 = arith.constant 0.000000e+00 : f32
      %268 = arith.cmpf one, %255, %cst_94 : f32
      %269 = arith.andi %267, %268 : i1
      %cst_95 = arith.constant 0.000000e+00 : f32
      %270 = arith.cmpf oeq, %255, %cst_95 : f32
      %cst_96 = arith.constant 0.000000e+00 : f32
      %271 = arith.cmpf one, %249, %cst_96 : f32
      %272 = arith.andi %270, %271 : i1
      %273 = arith.ori %269, %272 : i1
      %274 = arith.addf %259, %263 : f32
      %cst_97 = arith.constant 5.000000e-01 : f32
      %275 = arith.mulf %274, %cst_97 : f32
      %cst_98 = arith.constant 0.000000e+00 : f32
      %276 = arith.select %273, %263, %cst_98 : f32
      %277 = arith.select %266, %275, %276 : f32
      %c0_99 = arith.constant 0 : index
      %c0_100 = arith.constant 0 : index
      %278 = vector.load %arg7[%c0_99, %c0_100] : memref<8x1xf32, #tpu.memory_space<vmem>>, vector<8x1xf32>
      %cst_101 = arith.constant 1.000000e+00 : f32
      %279 = vector.broadcast %cst_101 : f32 to vector<8x1xf32>
      %280 = arith.maximumf %278, %279 : vector<8x1xf32>
      %c0_102 = arith.constant 0 : index
      %c0_103 = arith.constant 0 : index
      %281 = vector.load %arg6[%c0_102, %c0_103] : memref<8x1xf32, #tpu.memory_space<vmem>>, vector<8x1xf32>
      %282 = arith.divf %281, %280 : vector<8x1xf32>
      %283 = vector.shape_cast %282 : vector<8x1xf32> to vector<1x8x1xf32>
      %cst_104 = arith.constant dense<0.000000e+00> : vector<1xf32>
      %284 = vector.multi_reduction <add>, %283, %cst_104 [1, 2] : vector<1x8x1xf32> to vector<1xf32>
      %285 = vector.shape_cast %284 : vector<1xf32> to vector<1x1x1xf32>
      %286 = vector.extract %285[0, 0, 0] : f32 from vector<1x1x1xf32>
      %cst_105 = arith.constant 1.250000e-01 : f32
      %287 = arith.mulf %286, %cst_105 : f32
      %288 = arith.addf %53, %75 : f32
      %289 = arith.addf %288, %227 : f32
      %290 = arith.addf %289, %287 : f32
      %291 = arith.addf %290, %277 : f32
      %292 = tpu.iota {dimensions = array<i32: 1>} : vector<1x128xi32>
      %cst_106 = arith.constant 0.000000e+00 : f32
      %293 = vector.broadcast %cst_106 : f32 to vector<1x128xf32>
      %c0_i32_107 = arith.constant 0 : i32
      %294 = vector.broadcast %c0_i32_107 : i32 to vector<1x128xi32>
      %295 = arith.cmpi eq, %292, %294 : vector<1x128xi32>
      %296 = vector.broadcast %291 : f32 to vector<1x128xf32>
      %297 = arith.select %295, %296, %293 : vector<1x128xi1>, vector<1x128xf32>
      %c1_i32 = arith.constant 1 : i32
      %298 = vector.broadcast %c1_i32 : i32 to vector<1x128xi32>
      %299 = arith.cmpi eq, %292, %298 : vector<1x128xi32>
      %300 = vector.broadcast %53 : f32 to vector<1x128xf32>
      %301 = arith.select %299, %300, %297 : vector<1x128xi1>, vector<1x128xf32>
      %c2_i32 = arith.constant 2 : i32
      %302 = vector.broadcast %c2_i32 : i32 to vector<1x128xi32>
      %303 = arith.cmpi eq, %292, %302 : vector<1x128xi32>
      %304 = vector.broadcast %75 : f32 to vector<1x128xf32>
      %305 = arith.select %303, %304, %301 : vector<1x128xi1>, vector<1x128xf32>
      %c3_i32 = arith.constant 3 : i32
      %306 = vector.broadcast %c3_i32 : i32 to vector<1x128xi32>
      %307 = arith.cmpi eq, %292, %306 : vector<1x128xi32>
      %308 = vector.broadcast %227 : f32 to vector<1x128xf32>
      %309 = arith.select %307, %308, %305 : vector<1x128xi1>, vector<1x128xf32>
      %c4_i32 = arith.constant 4 : i32
      %310 = vector.broadcast %c4_i32 : i32 to vector<1x128xi32>
      %311 = arith.cmpi eq, %292, %310 : vector<1x128xi32>
      %312 = vector.broadcast %287 : f32 to vector<1x128xf32>
      %313 = arith.select %311, %312, %309 : vector<1x128xi1>, vector<1x128xf32>
      %c5_i32 = arith.constant 5 : i32
      %314 = vector.broadcast %c5_i32 : i32 to vector<1x128xi32>
      %315 = arith.cmpi eq, %292, %314 : vector<1x128xi32>
      %316 = vector.broadcast %277 : f32 to vector<1x128xf32>
      %317 = arith.select %315, %316, %313 : vector<1x128xi1>, vector<1x128xf32>
      %c0_108 = arith.constant 0 : index
      %c0_109 = arith.constant 0 : index
      %318 = vector.load %arg5[%c0_108, %c0_109] : memref<1x128xf32, #tpu.memory_space<vmem>>, vector<1x128xf32>
      tpu.vector_store %arg5[%c0_108, %c0_109], %317 {strides = array<i32>} : memref<1x128xf32, #tpu.memory_space<vmem>>, vector<1x128xf32>,
    } else {
    }
    return
  }
  func.func @transform_0(%arg0: i32) -> (i32, i32) {
    %c0_i32 = arith.constant 0 : i32
    %c0_i32_0 = arith.constant 0 : i32
    %c0_i32_1 = arith.constant 0 : i32
    return %c0_i32, %c0_i32_0 : i32, i32
  }
  func.func @transform_1(%arg0: i32) -> (i32, i32) {
    %c0_i32 = arith.constant 0 : i32
    %c0_i32_0 = arith.constant 0 : i32
    %c0_i32_1 = arith.constant 0 : i32
    return %c0_i32, %c0_i32_0 : i32, i32
  }
  func.func @transform_2(%arg0: i32) -> (i32, i32) {
    %c0_i32 = arith.constant 0 : i32
    %c0_i32_0 = arith.constant 0 : i32
    return %c0_i32, %arg0 : i32, i32
  }
  func.func @transform_3(%arg0: i32) -> (i32, i32) {
    %c0_i32 = arith.constant 0 : i32
    %c0_i32_0 = arith.constant 0 : i32
    return %c0_i32, %arg0 : i32, i32
  }
  func.func @transform_4(%arg0: i32) -> (i32, i32) {
    %c0_i32 = arith.constant 0 : i32
    %c0_i32_0 = arith.constant 0 : i32
    %c0_i32_1 = arith.constant 0 : i32
    return %c0_i32, %c0_i32_0 : i32, i32
  }
}

</mosaic_0001>

<llo_original>
// kernel: tpu_custom_call.1
$region0: #{tpu_custom_call.1}
  #allocation0 [shape = 'u32[]', space=smem, size = 0x4, offset = 0x4, fixed_abs, tag = 'smem constant byte address 0x4 - core index']
  #allocation1 [shape = 'u32[144,128]{1,0:T(1,128)}', space=vmem, size = 0x12000, scoped, tag = 'internal scratch']
  #allocation2 [shape = 'f32[8,1]{1,0:T(8,128)}', space=vmem, size = 0x1000, scoped, tag = 'scratch operand']
  #allocation3 [shape = 'f32[8,1]{1,0:T(8,128)}', space=vmem, size = 0x1000, scoped, tag = 'scratch operand']
  %s0 = inlined_call_operand.hbm [shape: f32[8,8], index: 0, kind: input, shape index: {}]
  %s1 = inlined_call_operand.hbm [shape: f32[8,32], index: 1, kind: input, shape index: {}]
  %s2 = inlined_call_operand.hbm [shape: f32[8,1024], index: 2, kind: input, shape index: {}]
  %s3 = inlined_call_operand.hbm [shape: f32[8,1024], index: 3, kind: input, shape index: {}]
  %s4 = inlined_call_operand.hbm [shape: f32[1,128], index: 4, kind: output, shape index: {}]
  %s5 = sld [smem:[#allocation0]]
  $region50: #{tpu_custom_call.1} parent=0
    _
  %s7 = ssub.s32 1, %s5
  %s8 = scalar_select 0, %s7, %s5
  $region1: #{tpu_custom_call.1} parent=0
    #allocation4 [shape = 'u8[4096]{0}', space=vmem, size = 0x1000, scoped, tag = 'input window, operand 0, single buffered']
    #allocation5 [shape = 's32[1]{0}', space=sflag, size = 0x4, scoped, tag = 'scoped memory for tpu_custom_call.1']
    #allocation6 [shape = 's32[1]{0}', space=sflag, size = 0x4, scoped, tag = 'scoped memory for tpu_custom_call.1']
    #allocation7 [shape = 'u8[4096]{0}', space=vmem, size = 0x1000, scoped, tag = 'input window, operand 1, single buffered']
    #allocation8 [shape = 's32[1]{0}', space=sflag, size = 0x4, scoped, tag = 'scoped memory for tpu_custom_call.1']
    #allocation9 [shape = 'u8[32768]{0}', space=vmem, size = 0x8000, scoped, tag = 'input window, operand 2, single buffered']
    #allocation10 [shape = 'u8[32768]{0}', space=vmem, size = 0x8000, scoped, tag = 'input window, operand 3, single buffered']
    #allocation11 [shape = 's32[1]{0}', space=sflag, size = 0x4, scoped, tag = 'scoped memory for tpu_custom_call.1']
    #allocation12 [shape = 'u8[512]{0}', space=vmem, size = 0x400, scoped, tag = 'output window, operand 0, single buffered']
    %9 = vsyncpa [#allocation5], 0
    %10 = vsyncpa [#allocation8], 0
    %11 = vsyncpa [#allocation11], 0
    %12 = vsyncpa [#allocation6], 0
    // Predicated region
    $region2: #{tpu_custom_call.1} parent=1 // pred_check
      _
    $region3: #{tpu_custom_call.1} parent=1 // pred_check_branch
      %14 = sbr.rel (0) target = $region5
    $region4: #{tpu_custom_call.1} parent=1 // pred_region
      %s16 = ssub.s32 128, 128
      %17 = vsyncadd [#allocation5], %s16
      %s19 = sshll.u32 [#allocation4], 4
      %s20 = int_to_ptr.vmem [resolvable:$true] %s19
      %22 = dma.hbm_to_vmem [thread:$0]  %s0, 128, %s20, [#allocation5]
    $region5: #{tpu_custom_call.1} parent=1 // pred_fallthru
      _
    // Predicated region
    $region6: #{tpu_custom_call.1} parent=1 // pred_check
      _
    $region7: #{tpu_custom_call.1} parent=1 // pred_check_branch
      %24 = sbr.rel (0) target = $region9
    $region8: #{tpu_custom_call.1} parent=1 // pred_region
      %s26 = ssub.s32 128, 128
      %27 = vsyncadd [#allocation8], %s26
      %s29 = sshll.u32 [#allocation7], 4
      %s30 = int_to_ptr.vmem [resolvable:$true] %s29
      %32 = dma.hbm_to_vmem [thread:$0]  %s1, 128, %s30, [#allocation8]
    $region9: #{tpu_custom_call.1} parent=1 // pred_fallthru
      _
    // Predicated region
    $region10: #{tpu_custom_call.1} parent=1 // pred_check
      _
    $region11: #{tpu_custom_call.1} parent=1 // pred_check_branch
      %34 = sbr.rel (0) target = $region13
    $region12: #{tpu_custom_call.1} parent=1 // pred_region
      %s36 = ssub.s32 1024, 1024
      %37 = vsyncadd [#allocation8], %s36
      %s39 = sshll.u32 [#allocation9], 4
      %s40 = int_to_ptr.vmem [resolvable:$true] %s39
      %42 = dma.hbm_to_vmem [thread:$0]  %s2, 1024, %s40, [#allocation8]
    $region13: #{tpu_custom_call.1} parent=1 // pred_fallthru
      _
    // Predicated region
    $region14: #{tpu_custom_call.1} parent=1 // pred_check
      _
    $region15: #{tpu_custom_call.1} parent=1 // pred_check_branch
      %44 = sbr.rel (0) target = $region17
    $region16: #{tpu_custom_call.1} parent=1 // pred_region
      %s46 = ssub.s32 1024, 1024
      %47 = vsyncadd [#allocation11], %s46
      %s49 = sshll.u32 [#allocation10], 4
      %s50 = int_to_ptr.vmem [resolvable:$true] %s49
      %52 = dma.hbm_to_vmem [thread:$0]  %s3, 1024, %s50, [#allocation11]
    $region17: #{tpu_custom_call.1} parent=1 // pred_fallthru
      _
    // Predicated region
    $region18: #{tpu_custom_call.1} parent=1 // pred_check
      _
    $region19: #{tpu_custom_call.1} parent=1 // pred_check_branch
      %54 = sbr.rel (0) target = $region21
    $region20: #{tpu_custom_call.1} parent=1 // pred_region
      %55 = dma.done [#allocation5], 128
    $region21: #{tpu_custom_call.1} parent=1 // pred_fallthru
      _
    // Predicated region
    $region22: #{tpu_custom_call.1} parent=1 // pred_check
      _
    $region23: #{tpu_custom_call.1} parent=1 // pred_check_branch
      %57 = sbr.rel (0) target = $region25
    $region24: #{tpu_custom_call.1} parent=1 // pred_region
      %58 = dma.done [#allocation8], 128
    $region25: #{tpu_custom_call.1} parent=1 // pred_fallthru
      _
    // Predicated region
    $region26: #{tpu_custom_call.1} parent=1 // pred_check
      _
    $region27: #{tpu_custom_call.1} parent=1 // pred_check_branch
      %60 = sbr.rel (0) target = $region29
    $region28: #{tpu_custom_call.1} parent=1 // pred_region
      %61 = dma.done [#allocation8], 1024
    $region29: #{tpu_custom_call.1} parent=1 // pred_fallthru
      _
    // Predicated region
    $region30: #{tpu_custom_call.1} parent=1 // pred_check
      _
    $region31: #{tpu_custom_call.1} parent=1 // pred_check_branch
      %63 = sbr.rel (0) target = $region33
    $region32: #{tpu_custom_call.1} parent=1 // pred_region
      %64 = dma.done [#allocation11], 1024
    $region33: #{tpu_custom_call.1} parent=1 // pred_fallthru
      _
    %p65 = scmp.eq.s32.totalorder 0, 0
    // Predicated region
    $region34: #{tpu_custom_call.1} parent=1 // pred_check
      %p66 = pneg %p65
    $region35: #{tpu_custom_call.1} parent=1 // pred_check_branch
      %68 = sbr.rel (%p66) target = $region37
    $region36: #{tpu_custom_call.1} parent=1 // pred_region
      %vm69 = vcmask 7168
      %70 = vst.msk [vmem:[#allocation2] sm:$0xff] %vm69, 0.0
      %71 = vst.msk [vmem:[#allocation3] sm:$0xff] %vm69, 0.0
    $region37: #{tpu_custom_call.1} parent=1 // pred_fallthru
      _
    %v72 = vld [vmem:[#allocation9] sm:$0xff]
    %v73 = vld [vmem:[#allocation9 + $0x8] sm:$0xff]
    %v74 = vld [vmem:[#allocation9 + $0x10] sm:$0xff]
    %v75 = vld [vmem:[#allocation9 + $0x18] sm:$0xff]
    %v76 = vld [vmem:[#allocation9 + $0x20] sm:$0xff]
    %v77 = vld [vmem:[#allocation9 + $0x28] sm:$0xff]
    %v78 = vld [vmem:[#allocation9 + $0x30] sm:$0xff]
    %v79 = vld [vmem:[#allocation9 + $0x38] sm:$0xff]
    %v80 = vld [vmem:[#allocation10] sm:$0xff]
    %v81 = vld [vmem:[#allocation10 + $0x8] sm:$0xff]
    %v82 = vld [vmem:[#allocation10 + $0x10] sm:$0xff]
    %v83 = vld [vmem:[#allocation10 + $0x18] sm:$0xff]
    %v84 = vld [vmem:[#allocation10 + $0x20] sm:$0xff]
    %v85 = vld [vmem:[#allocation10 + $0x28] sm:$0xff]
    %v86 = vld [vmem:[#allocation10 + $0x30] sm:$0xff]
    %v87 = vld [vmem:[#allocation10 + $0x38] sm:$0xff]
    %vm88 = vcmp.ne.f32.partialorder %v72, 0.0
    %vm89 = vcmp.ne.f32.partialorder %v73, 0.0
    %vm90 = vcmp.ne.f32.partialorder %v74, 0.0
    %vm91 = vcmp.ne.f32.partialorder %v75, 0.0
    %vm92 = vcmp.ne.f32.partialorder %v76, 0.0
    %vm93 = vcmp.ne.f32.partialorder %v77, 0.0
    %vm94 = vcmp.ne.f32.partialorder %v78, 0.0
    %vm95 = vcmp.ne.f32.partialorder %v79, 0.0
    %v96 = vsel %vm88, 1.0, 0.0
    %v97 = vsel %vm89, 1.0, 0.0
    %v98 = vsel %vm90, 1.0, 0.0
    %v99 = vsel %vm91, 1.0, 0.0
    %v100 = vsel %vm92, 1.0, 0.0
    %v101 = vsel %vm93, 1.0, 0.0
    %v102 = vsel %vm94, 1.0, 0.0
    %v103 = vsel %vm95, 1.0, 0.0
    %v104 = vld [vmem:[#allocation2] sm:$0xff]
    %v105 = vsub.f32 %v72, %v80
    %v106 = vsub.f32 %v73, %v81
    %v107 = vsub.f32 %v74, %v82
    %v108 = vsub.f32 %v75, %v83
    %v109 = vsub.f32 %v76, %v84
    %v110 = vsub.f32 %v77, %v85
    %v111 = vsub.f32 %v78, %v86
    %v112 = vsub.f32 %v79, %v87
    %v113 = vand.u32 2147483647, %v105
    %v114 = vand.u32 2147483647, %v106
    %v115 = vand.u32 2147483647, %v107
    %v116 = vand.u32 2147483647, %v108
    %v117 = vand.u32 2147483647, %v109
    %v118 = vand.u32 2147483647, %v110
    %v119 = vand.u32 2147483647, %v111
    %v120 = vand.u32 2147483647, %v112
    %v121 = vmul.f32 %v113, %v96
    %v122 = vmul.f32 %v114, %v97
    %v123 = vmul.f32 %v115, %v98
    %v124 = vmul.f32 %v116, %v99
    %v125 = vmul.f32 %v117, %v100
    %v126 = vmul.f32 %v118, %v101
    %v127 = vmul.f32 %v119, %v102
    %v128 = vmul.f32 %v120, %v103
    %v129 = vadd.f32 %v121, %v122
    %v130 = vadd.f32 %v129, %v123
    %v131 = vadd.f32 %v130, %v124
    %v132 = vadd.f32 %v131, %v125
    %v133 = vadd.f32 %v132, %v126
    %v134 = vadd.f32 %v133, %v127
    %v135 = vadd.f32 %v134, %v128
    %136 = vadd.xlane.f32.xlu0 %v135
    %v137 = vpop.xlane.xlu0 %136
    %v138 = vadd.f32 %v104, %v137
    %vm139 = vcmask 7168
    %140 = vst.msk [vmem:[#allocation2] sm:$0xff] %vm139, %v138
    %v141 = vld [vmem:[#allocation3] sm:$0xff]
    %v142 = vadd.f32 %v96, %v97
    %v143 = vadd.f32 %v142, %v98
    %v144 = vadd.f32 %v143, %v99
    %v145 = vadd.f32 %v144, %v100
    %v146 = vadd.f32 %v145, %v101
    %v147 = vadd.f32 %v146, %v102
    %v148 = vadd.f32 %v147, %v103
    %149 = vadd.xlane.f32.xlu0 %v148
    %v150 = vpop.xlane.xlu0 %149
    %v151 = vadd.f32 %v141, %v150
    %152 = vst.msk [vmem:[#allocation3] sm:$0xff] %vm139, %v151
    // Predicated region
    $region38: #{tpu_custom_call.1} parent=1 // pred_check
      %p153 = pneg %p65
    $region39: #{tpu_custom_call.1} parent=1 // pred_check_branch
      %155 = sbr.rel (%p153) target = $region41
    $region40: #{tpu_custom_call.1} parent=1 // pred_region
      %v156 = vld [vmem:[#allocation4] sm:$0xff]
      %v157 = vld [vmem:[#allocation7] sm:$0xff]
      %vm158 = vcmask 23560
      %v159 = vsel %vm158, %v156, -inf
      %160 = vmax.xlane.f32.xlu0 %v159
      %v161 = vpop.xlane.xlu0 %160
      %v162 = vsub.f32 %v156, %v161
      %v163 = vmul.f32 %v162, 1.442695
      %v164 = vpow.pop %v163
      %166 = vrot.lane.b32.xlu0 %v164, 127
      %v167 = vpop.permute.xlu0 %166
      %vm169 = vcmask 15360
      %v170 = vsel %vm169, %v167, 0.0
      %171 = vadd.xlane.f32.xlu0 %v170
      %v172 = vpop.xlane.xlu0 %171
      %v173 = vlog2.pop %v172
      %v174 = vmul.f32 %v173, 0.6931472
      %v175 = vadd.f32 %v161, %v174
      %177 = vrot.lane.b32.xlu0 %v156, 126
      %v178 = vpop.permute.xlu0 %177
      %v180 = vmul.f32 %v156, %v178
      %v181 = vsub.f32 1.0, %v156
      %182 = vrot.lane.b32.xlu0 %v156, 127
      %v183 = vpop.permute.xlu0 %182
      %v185 = vmul.f32 %v181, %v183
      %v186 = vadd.f32 %v180, %v185
      %v187 = vsub.f32 %v175, %v186
      %v188 = vsel %vm139, %v187, 0.0
      %189 = vadd.xlane.f32.xlu0 %v188
      %v190 = vpop.xlane.xlu0 %189
      %v191 = vrot.slane %v190, 4
      %v192 = vadd.f32 %v190, %v191
      %v193 = vrot.slane %v192, 2
      %v194 = vadd.f32 %v192, %v193
      %v195 = vrot.slane %v194, 1
      %v196 = vadd.f32 %v194, %v195
      %s197 = vtos %v196
      %s198 = smul.f32 %s197, 0.125
      %vm199 = vcmask 39960
      %v200 = vsel %vm199, %v156, -inf
      %201 = vmax.xlane.f32.xlu0 %v200
      %v202 = vpop.xlane.xlu0 %201
      %v203 = vsub.f32 %v156, %v202
      %v204 = vmul.f32 %v203, 1.442695
      %v205 = vpow.pop %v204
      %207 = vrot.lane.b32.xlu0 %v205, 125
      %v208 = vpop.permute.xlu0 %207
      %v210 = vsel %vm169, %v208, 0.0
      %211 = vadd.xlane.f32.xlu0 %v210
      %v212 = vpop.xlane.xlu0 %211
      %v213 = vlog2.pop %v212
      %v214 = vmul.f32 %v213, 0.6931472
      %v215 = vadd.f32 %v202, %v214
      %216 = vrot.lane.b32.xlu0 %v156, 124
      %v217 = vpop.permute.xlu0 %216
      %v219 = vmul.f32 %v156, %v217
      %220 = vrot.lane.b32.xlu0 %v156, 125
      %v221 = vpop.permute.xlu0 %220
      %v223 = vmul.f32 %v181, %v221
      %v224 = vadd.f32 %v219, %v223
      %v225 = vsub.f32 %v215, %v224
      %v226 = vsel %vm139, %v225, 0.0
      %227 = vadd.xlane.f32.xlu0 %v226
      %v228 = vpop.xlane.xlu0 %227
      %v229 = vrot.slane %v228, 4
      %v230 = vadd.f32 %v228, %v229
      %v231 = vrot.slane %v230, 2
      %v232 = vadd.f32 %v230, %v231
      %v233 = vrot.slane %v232, 1
      %v234 = vadd.f32 %v232, %v233
      %s235 = vtos %v234
      %s236 = smul.f32 %s235, 0.125
      %v237 = vrcp.pop %v212
      %v238 = vmul.f32 %v205, %v237
      %240 = vrot.lane.b32.xlu0 %v238, 1
      %v241 = vpop.permute.xlu0 %240
      %vm243 = vcmp.gt.f32.partialorder %v238, %v241
      %v244 = vsel %vm243, 1, 0
      %v245 = vcvt.s32.f32 %v244
      %247 = vrot.lane.b32.xlu0 %v245, 124
      %v248 = vpop.permute.xlu0 %247
      %v250 = vmul.f32 %v156, %v248
      %251 = vrot.lane.b32.xlu0 %v238, 124
      %v252 = vpop.permute.xlu0 %251
      %v254 = vmul.f32 %v250, %v252
      %v255 = vsub.f32 1.0, %v245
      %257 = vrot.lane.b32.xlu0 %v255, 124
      %v258 = vpop.permute.xlu0 %257
      %v260 = vmul.f32 %v181, %v258
      %261 = vrot.lane.b32.xlu0 %v238, 125
      %v262 = vpop.permute.xlu0 %261
      %v264 = vmul.f32 %v260, %v262
      %v265 = vsel %vm139, %v254, 0.0
      %266 = vadd.xlane.f32.xlu0 %v265
      %v267 = vpop.xlane.xlu0 %266
      %v268 = vrot.slane %v267, 4
      %v269 = vadd.f32 %v267, %v268
      %v270 = vrot.slane %v269, 2
      %v271 = vadd.f32 %v269, %v270
      %v272 = vrot.slane %v271, 1
      %v273 = vadd.f32 %v271, %v272
      %s274 = vtos %v273
      %v275 = vsel %vm139, %v264, 0.0
      %276 = vadd.xlane.f32.xlu0 %v275
      %v277 = vpop.xlane.xlu0 %276
      %v278 = vrot.slane %v277, 4
      %v279 = vadd.f32 %v277, %v278
      %v280 = vrot.slane %v279, 2
      %v281 = vadd.f32 %v279, %v280
      %v282 = vrot.slane %v281, 1
      %v283 = vadd.f32 %v281, %v282
      %s284 = vtos %v283
      %s285 = sadd.f32 %s274, 0.0001
      %v286 = vstv %s285
      %v287 = vrcp.pop %v286
      %v288 = vmul.f32 %v254, %v287
      %s289 = sadd.f32 %s284, 0.0001
      %v290 = vstv %s289
      %v291 = vrcp.pop %v290
      %v292 = vmul.f32 %v264, %v291
      %294 = vset.pattern.permute.xlu0 0
      %295 = vperm.xlu0 %294, %v288
      %v296 = vpop.permute.xlu0 %295
      %v298 = vmul.f32 %v296, %v157
      %vm299 = vcmask 261120
      %v300 = vsel %vm299, %v298, 0.0
      %v301 = vrot.slane %v300, 4
      %v302 = vadd.f32 %v300, %v301
      %v303 = vrot.slane %v302, 2
      %v304 = vadd.f32 %v302, %v303
      %v305 = vrot.slane %v304, 1
      %v306 = vadd.f32 %v304, %v305
      %308 = vset.pattern.permute.xlu0 0
      %309 = vperm.xlu0 %308, %v292
      %v310 = vpop.permute.xlu0 %309
      %v312 = vmul.f32 %v310, %v157
      %v313 = vsel %vm299, %v312, 0.0
      %v314 = vrot.slane %v313, 4
      %v315 = vadd.f32 %v313, %v314
      %v316 = vrot.slane %v315, 2
      %v317 = vadd.f32 %v315, %v316
      %v318 = vrot.slane %v317, 1
      %v319 = vadd.f32 %v317, %v318
      %v320 = vsub.f32 %v157, %v306
      %v321 = vmul.f32 %v320, %v320
      %v322 = vsel %vm299, %v321, 0.0
      %323 = vadd.xlane.f32.xlu0 %v322
      %v324 = vpop.xlane.xlu0 %323
      %v325 = vadd.f32 %v324, 3.125e-06
      %v326 = vrsqrt.pop %v325
      %v327 = vmul.f32 %v325, %v326
      %vm328 = vcmp.eq.f32.partialorder %v325, inf
      %v329 = vsel %vm328, %v325, %v327
      %vm330 = vcmp.eq.f32.partialorder %v325, 0.0
      %v331 = vand.u32 %v325, 2147483648
      %v332 = vsel %vm330, %v331, %v329
      %v333 = vsel %vm139, %v156, 0.0
      %334 = vadd.xlane.f32.xlu0 %v333
      %v335 = vpop.xlane.xlu0 %334
      %v336 = vrot.slane %v335, 4
      %v337 = vadd.f32 %v335, %v336
      %v338 = vrot.slane %v337, 2
      %v339 = vadd.f32 %v337, %v338
      %v340 = vrot.slane %v339, 1
      %v341 = vadd.f32 %v339, %v340
      %s342 = vtos %v341
      %v343 = vmul.f32 %v332, %v156
      %v344 = vsel %vm139, %v343, 0.0
      %345 = vadd.xlane.f32.xlu0 %v344
      %v346 = vpop.xlane.xlu0 %345
      %v347 = vrot.slane %v346, 4
      %v348 = vadd.f32 %v346, %v347
      %v349 = vrot.slane %v348, 2
      %v350 = vadd.f32 %v348, %v349
      %v351 = vrot.slane %v350, 1
      %v352 = vadd.f32 %v350, %v351
      %s353 = vtos %v352
      %s354 = smax.f32 %s342, 1.0
      %v355 = vstv %s354
      %v356 = vrcp.pop %v355
      %s357 = vtos %v356
      %s358 = smul.f32 %s353, %s357
      %v359 = vstv %s358
      %v360 = vsub.f32 %v332, %v359
      %v361 = vmax.f32 %v360, 0.0
      %v362 = vmul.f32 %v361, %v156
      %vm363 = vcmp.ne.f32.partialorder %v362, 0.0
      %v364 = vsel %vm363, 1.0, 0.0
      %v365 = vsel %vm139, %v364, 0.0
      %366 = vadd.xlane.f32.xlu0 %v365
      %v367 = vpop.xlane.xlu0 %366
      %v368 = vrot.slane %v367, 4
      %v369 = vadd.f32 %v367, %v368
      %v370 = vrot.slane %v369, 2
      %v371 = vadd.f32 %v369, %v370
      %v372 = vrot.slane %v371, 1
      %v373 = vadd.f32 %v371, %v372
      %s374 = vtos %v373
      %p375 = scmp.gt.f32.partialorder %s374, 0.0
      %v376 = vsel %vm139, %v362, 0.0
      %377 = vadd.xlane.f32.xlu0 %v376
      %v378 = vpop.xlane.xlu0 %377
      %v379 = vrot.slane %v378, 4
      %v380 = vadd.f32 %v378, %v379
      %v381 = vrot.slane %v380, 2
      %v382 = vadd.f32 %v380, %v381
      %v383 = vrot.slane %v382, 1
      %v384 = vadd.f32 %v382, %v383
      %s385 = vtos %v384
      %s386 = smax.f32 %s374, 1.0
      %v387 = vstv %s386
      %v388 = vrcp.pop %v387
      %s389 = vtos %v388
      %s390 = smul.f32 %s385, %s389
      %s391 = scalar_select %p375, %s390, 0.0
      %v392 = vsub.f32 %v157, %v319
      %v393 = vmul.f32 %v392, %v392
      %v394 = vsel %vm299, %v393, 0.0
      %395 = vadd.xlane.f32.xlu0 %v394
      %v396 = vpop.xlane.xlu0 %395
      %v397 = vadd.f32 %v396, 3.125e-06
      %v398 = vrsqrt.pop %v397
      %v399 = vmul.f32 %v397, %v398
      %vm400 = vcmp.eq.f32.partialorder %v397, inf
      %v401 = vsel %vm400, %v397, %v399
      %vm402 = vcmp.eq.f32.partialorder %v397, 0.0
      %v403 = vand.u32 %v397, 2147483648
      %v404 = vsel %vm402, %v403, %v401
      %v405 = vsel %vm139, %v181, 0.0
      %406 = vadd.xlane.f32.xlu0 %v405
      %v407 = vpop.xlane.xlu0 %406
      %v408 = vrot.slane %v407, 4
      %v409 = vadd.f32 %v407, %v408
      %v410 = vrot.slane %v409, 2
      %v411 = vadd.f32 %v409, %v410
      %v412 = vrot.slane %v411, 1
      %v413 = vadd.f32 %v411, %v412
      %s414 = vtos %v413
      %v415 = vmul.f32 %v404, %v181
      %v416 = vsel %vm139, %v415, 0.0
      %417 = vadd.xlane.f32.xlu0 %v416
      %v418 = vpop.xlane.xlu0 %417
      %v419 = vrot.slane %v418, 4
      %v420 = vadd.f32 %v418, %v419
      %v421 = vrot.slane %v420, 2
      %v422 = vadd.f32 %v420, %v421
      %v423 = vrot.slane %v422, 1
      %v424 = vadd.f32 %v422, %v423
      %s425 = vtos %v424
      %s426 = smax.f32 %s414, 1.0
      %v427 = vstv %s426
      %v428 = vrcp.pop %v427
      %s429 = vtos %v428
      %s430 = smul.f32 %s425, %s429
      %v431 = vstv %s430
      %v432 = vsub.f32 %v404, %v431
      %v433 = vmax.f32 %v432, 0.0
      %v434 = vmul.f32 %v433, %v181
      %vm435 = vcmp.ne.f32.partialorder %v434, 0.0
      %v436 = vsel %vm435, 1.0, 0.0
      %v437 = vsel %vm139, %v436, 0.0
      %438 = vadd.xlane.f32.xlu0 %v437
      %v439 = vpop.xlane.xlu0 %438
      %v440 = vrot.slane %v439, 4
      %v441 = vadd.f32 %v439, %v440
      %v442 = vrot.slane %v441, 2
      %v443 = vadd.f32 %v441, %v442
      %v444 = vrot.slane %v443, 1
      %v445 = vadd.f32 %v443, %v444
      %s446 = vtos %v445
      %p447 = scmp.gt.f32.partialorder %s446, 0.0
      %v448 = vsel %vm139, %v434, 0.0
      %449 = vadd.xlane.f32.xlu0 %v448
      %v450 = vpop.xlane.xlu0 %449
      %v451 = vrot.slane %v450, 4
      %v452 = vadd.f32 %v450, %v451
      %v453 = vrot.slane %v452, 2
      %v454 = vadd.f32 %v452, %v453
      %v455 = vrot.slane %v454, 1
      %v456 = vadd.f32 %v454, %v455
      %s457 = vtos %v456
      %s458 = smax.f32 %s446, 1.0
      %v459 = vstv %s458
      %v460 = vrcp.pop %v459
      %s461 = vtos %v460
      %s462 = smul.f32 %s457, %s461
      %s463 = scalar_select %p447, %s462, 0.0
      %p464 = scmp.eq.f32.partialorder %s284, 0.0
      %p465 = scmp.ne.f32.partialorder %s274, 0.0
      %p466 = pnand %p464, %p465
      %p467 = pneg %p466
      %p468 = scmp.eq.f32.partialorder %s274, 0.0
      %p469 = scmp.ne.f32.partialorder %s284, 0.0
      %p470 = pnand %p468, %p469
      %p471 = pneg %p470
      %p472 = pnand %p465, %p469
      %p473 = pneg %p472
      %s474 = sadd.f32 %s391, %s463
      %s475 = scalar_select %p471, %s463, 0.0
      %s476 = scalar_select %p467, %s391, %s475
      %s477 = scalar_select %p473, %s474, %s476
      %v478 = vmul.f32 %v254, %v252
      %v479 = vmul.f32 %v264, %v262
      %v480 = vadd.f32 %v478, %v479
      %v481 = vsel %vm139, %v480, 0.0
      %482 = vadd.xlane.f32.xlu0 %v481
      %v483 = vpop.xlane.xlu0 %482
      %v484 = vrot.slane %v483, 4
      %v485 = vadd.f32 %v483, %v484
      %v486 = vrot.slane %v485, 2
      %v487 = vadd.f32 %v485, %v486
      %v488 = vrot.slane %v487, 1
      %v489 = vadd.f32 %v487, %v488
      %s490 = vtos %v489
      %s491 = smul.f32 %s490, 0.125
      %p492 = scmp.gt.f32.partialorder %s491, 0.5
      %s493 = scalar_select %p492, %s491, 0.0
      %s494 = smul.f32 %s477, %s493
      %vm495 = vcmask 56360
      %v496 = vsel %vm495, %v156, -inf
      %497 = vmax.xlane.f32.xlu0 %v496
      %v498 = vpop.xlane.xlu0 %497
      %v499 = vsub.f32 %v156, %v498
      %v500 = vmul.f32 %v499, 1.442695
      %v501 = vpow.pop %v500
      %503 = vrot.lane.b32.xlu0 %v501, 123
      %v504 = vpop.permute.xlu0 %503
      %v506 = vsel %vm169, %v504, 0.0
      %507 = vadd.xlane.f32.xlu0 %v506
      %v508 = vpop.xlane.xlu0 %507
      %v509 = vrcp.pop %v508
      %v510 = vmul.f32 %v501, %v509
      %512 = vrot.lane.b32.xlu0 %v510, 126
      %v513 = vpop.permute.xlu0 %512
      %v515 = vsub.f32 %v238, %v513
      %v516 = vmax.f32 %v515, 0.0
      %517 = vrot.lane.b32.xlu0 %v156, 4
      %v518 = vpop.permute.xlu0 %517
      %v520 = vmul.f32 %v516, %v518
      %522 = vrot.lane.b32.xlu0 %v181, 3
      %v523 = vpop.permute.xlu0 %522
      %v525 = vmul.f32 %v516, %v523
      %527 = vrot.lane.b32.xlu0 %v520, 124
      %v528 = vpop.permute.xlu0 %527
      %v530 = vsel %vm139, %v528, 0.0
      %531 = vadd.xlane.f32.xlu0 %v530
      %v532 = vpop.xlane.xlu0 %531
      %v533 = vrot.slane %v532, 4
      %v534 = vadd.f32 %v532, %v533
      %v535 = vrot.slane %v534, 2
      %v536 = vadd.f32 %v534, %v535
      %v537 = vrot.slane %v536, 1
      %v538 = vadd.f32 %v536, %v537
      %s539 = vtos %v538
      %541 = vrot.lane.b32.xlu0 %v525, 125
      %v542 = vpop.permute.xlu0 %541
      %v544 = vsel %vm139, %v542, 0.0
      %545 = vadd.xlane.f32.xlu0 %v544
      %v546 = vpop.xlane.xlu0 %545
      %v547 = vrot.slane %v546, 4
      %v548 = vadd.f32 %v546, %v547
      %v549 = vrot.slane %v548, 2
      %v550 = vadd.f32 %v548, %v549
      %v551 = vrot.slane %v550, 1
      %v552 = vadd.f32 %v550, %v551
      %s553 = vtos %v552
      %p554 = scmp.ne.f32.partialorder %s342, 0.0
      %p555 = scmp.ne.f32.partialorder %s414, 0.0
      %p556 = pnand %p554, %p555
      %p557 = pneg %p556
      %p558 = scmp.eq.f32.partialorder %s342, 0.0
      %p559 = pnand %p558, %p555
      %p560 = pneg %p559
      %p561 = scmp.eq.f32.partialorder %s414, 0.0
      %p562 = pnand %p561, %p554
      %p563 = pneg %p562
      %p564 = por %p560, %p563
      %s565 = sadd.f32 %s539, %s553
      %s566 = smul.f32 %s565, 0.5
      %s567 = scalar_select %p564, %s553, 0.0
      %s568 = scalar_select %p557, %s566, %s567
      %v569 = vld [vmem:[#allocation3] sm:$0xff]
      %v570 = vmax.f32 %v569, 1.0
      %v571 = vld [vmem:[#allocation2] sm:$0xff]
      %v572 = vrcp.pop %v570
      %v573 = vmul.f32 %v571, %v572
      %v574 = vsel %vm139, %v573, 0.0
      %575 = vadd.xlane.f32.xlu0 %v574
      %v576 = vpop.xlane.xlu0 %575
      %v577 = vrot.slane %v576, 4
      %v578 = vadd.f32 %v576, %v577
      %v579 = vrot.slane %v578, 2
      %v580 = vadd.f32 %v578, %v579
      %v581 = vrot.slane %v580, 1
      %v582 = vadd.f32 %v580, %v581
      %s583 = vtos %v582
      %s584 = smul.f32 %s583, 0.125
      %s585 = sadd.f32 %s198, %s236
      %s586 = sadd.f32 %s585, %s494
      %s587 = sadd.f32 %s586, %s584
      %s588 = sadd.f32 %s587, %s568
      %v589 = vlaneseq
      %v590 = vand.u32 %v589, 127
      %vm591 = vcmp.eq.s32.totalorder %v590, 0
      %v592 = vstv %s588
      %v593 = vsel %vm591, %v592, 0.0
      %vm594 = vcmp.eq.s32.totalorder %v590, 1
      %v595 = vstv %s198
      %v596 = vsel %vm594, %v595, %v593
      %vm597 = vcmp.eq.s32.totalorder %v590, 2
      %v598 = vstv %s236
      %v599 = vsel %vm597, %v598, %v596
      %vm600 = vcmp.eq.s32.totalorder %v590, 3
      %v601 = vstv %s494
      %v602 = vsel %vm600, %v601, %v599
      %vm603 = vcmp.eq.s32.totalorder %v590, 4
      %v604 = vstv %s584
      %v605 = vsel %vm603, %v604, %v602
      %vm606 = vcmp.eq.s32.totalorder %v590, 5
      %v607 = vstv %s568
      %v608 = vsel %vm606, %v607, %v605
      %609 = vst [vmem:[#allocation12] sm:$0x1] %v608
    $region41: #{tpu_custom_call.1} parent=1 // pred_fallthru
      _
    // Predicated region
    $region42: #{tpu_custom_call.1} parent=1 // pred_check
      _
    $region43: #{tpu_custom_call.1} parent=1 // pred_check_branch
      %611 = sbr.rel (0) target = $region45
    $region44: #{tpu_custom_call.1} parent=1 // pred_region
      %s613 = ssub.s32 16, 16
      %614 = vsyncadd [#allocation6], %s613
      %s616 = sshll.u32 [#allocation12], 4
      %s617 = int_to_ptr.vmem [resolvable:$true] %s616
      %619 = dma.vmem_to_hbm [thread:$0]  %s617, 16, %s4, [#allocation6]
    $region45: #{tpu_custom_call.1} parent=1 // pred_fallthru
      _
    // Predicated region
    $region46: #{tpu_custom_call.1} parent=1 // pred_check
      _
    $region47: #{tpu_custom_call.1} parent=1 // pred_check_branch
      %621 = sbr.rel (0) target = $region49
    $region48: #{tpu_custom_call.1} parent=1 // pred_region
      %622 = dma.done [#allocation6], 16
    $region49: #{tpu_custom_call.1} parent=1 // pred_fallthru
      _
    %623 = vsyncpa [#allocation5], 1
    %624 = vsyncpa [#allocation8], 1
    %625 = vsyncpa [#allocation11], 1
    %626 = vsyncpa [#allocation6], 1

</llo_original>
